<compile_context>
chip_gen: v5e
topology: v5e:2x2
jax: 0.10.0
libtpu: 0.0.40
codegen_flags: <defaults>
</compile_context>

<pallas_src>
import functools

import jax
import jax.numpy as jnp
from jax.experimental import pallas as pl
from jax.experimental.pallas import tpu as pltpu


def _round_up(x, m):
    return ((x + m - 1) // m) * m


def _tpu_device_kind():
    try:
        return jax.devices()[0].device_kind.lower()
    except Exception:
        return ""


def _vmem_capacity_bytes():
    try:
        return int(pltpu.get_tpu_info().vmem_capacity_bytes)
    except Exception:
        return 64 << 20  # conservative floor (v7x per-TC VMEM)


def _make_decoder_kernel(num_layers, compute_dtype):
    """Fused MLP kernel for `num_layers` Linear layers.

    Ref order: x_ref, (w0, b0, w1, b1, ..., w_{L-1}, b_{L-1}), out_ref.
    ReLU after every layer except the last. Accumulation / bias / ReLU stay f32;
    MXU inputs are in `compute_dtype` (x arrives pre-cast, so no input round-trip).
    """
    compute_dtype = jnp.dtype(compute_dtype)

    def kernel(*refs):
        x_ref = refs[0]
        out_ref = refs[-1]
        h = x_ref[...]                               # already in compute dtype
        for layer in range(num_layers):
            w = refs[1 + 2 * layer][...]
            b = refs[2 + 2 * layer][...]             # f32, shape (1, n_pad)
            h = jnp.dot(h, w, preferred_element_type=jnp.float32) + b
            if layer < num_layers - 1:
                h = jnp.maximum(h, 0.0)              # ReLU in f32 (v5e-friendly VPU)
                if compute_dtype != jnp.float32:
                    h = h.astype(compute_dtype)      # feed next MXU pass in bf16
        out_ref[...] = h.astype(out_ref.dtype)

    return kernel


def init_decoder_params(key, embedding_dim, decompress_dims, data_dim):
    """Deterministic init mirroring the PyTorch module's layer shapes.

    Linear(i -> o): weight stored pre-transposed as (i, o), bias as (1, o), both f32.
    """
    dims = [embedding_dim] + list(decompress_dims) + [data_dim]
    params = []
    for i in range(len(dims) - 1):
        fan_in, fan_out = dims[i], dims[i + 1]
        key, kw, kb = jax.random.split(key, 3)
        bound = 1.0 / jnp.sqrt(jnp.float32(fan_in))
        w = jax.random.uniform(kw, (fan_in, fan_out), jnp.float32, -bound, bound)
        b = jax.random.uniform(kb, (1, fan_out), jnp.float32, -bound, bound)
        params.append((w, b))
    sigma = jnp.ones((data_dim,), jnp.float32) * 0.1
    return params, sigma


def prepare_decoder_params(params, weight_dtype=jnp.bfloat16):
    """One-time prep: zero-pad all feature dims (K and N) to multiples of 128.

    Weights are cast to `weight_dtype` (bf16 -> MXU-fast on v6e/v7x); biases stay f32
    since bias-add / ReLU run on the f32 accumulator. Zero-padded weight rows/cols and
    zero bias entries keep the padded computation exact.
    """
    padded = []
    for (w, b) in params:
        k, n = w.shape
        k_pad = _round_up(k, 128)
        n_pad = _round_up(n, 128)
        w_p = jnp.zeros((k_pad, n_pad), weight_dtype).at[:k, :n].set(w.astype(weight_dtype))
        b_p = jnp.zeros((1, n_pad), jnp.float32).at[:, :n].set(
            jnp.asarray(b, jnp.float32).reshape(1, -1)
        )
        padded.append((w_p, b_p))
    return padded


@functools.partial(jax.jit, static_argnames=("tm", "out_dtype"))
def decoder_forward(x, padded_params, sigma, *, tm=None, out_dtype=None):
    """Fused decoder MLP Pallas kernel. Returns (output[B, data_dim], sigma)."""
    B, emb = x.shape
    num_layers = len(padded_params)
    emb_pad = padded_params[0][0].shape[0]
    out_pad = padded_params[-1][0].shape[1]
    data_dim = sigma.shape[0]
    assert emb <= emb_pad, "first weight K must cover x features"

    compute_dtype = jnp.dtype(padded_params[0][0].dtype)
    out_dtype = jnp.dtype(x.dtype if out_dtype is None else out_dtype)

    # --- Generation-aware tile selection ---------------------------------------------
    kind = _tpu_device_kind()
    is_v5e = ("v5 lite" in kind) or ("v5e" in kind) or ("v5litepod" in kind)
    num_cores = 2 if "v7" in kind else 1     # v7x: 2 TensorCores/chip
    if tm is None:
        tm = 128 if is_v5e else 256          # v5e MXU is 128x128; v6e/v7x is 256x256

    # Round the batch tile to the packed-sublane multiple of the compute dtype so the
    # last tile's loads/stores stay unmasked.
    sub = 16 if compute_dtype == jnp.bfloat16 else 8
    b_pad_min = _round_up(B, sub)
    tm_eff = _round_up(min(tm, b_pad_min), sub)
    # v7x: guarantee >= 2 grid steps when the batch permits so both TCs get work.
    if num_cores >= 2 and b_pad_min >= 2 * sub:
        tm_eff = min(tm_eff, _round_up(-(-b_pad_min // 2), sub))
    padded_B = _round_up(B, tm_eff)
    grid = (padded_B // tm_eff,)

    # --- Input prep: cast once (no in-kernel round trip) and fold K-pad into batch pad --
    if x.dtype != compute_dtype:
        x = x.astype(compute_dtype)
    if padded_B != B or emb_pad != emb:
        x = jnp.pad(x, ((0, padded_B - B), (0, emb_pad - emb)))

    # --- Specs: x/out are pipelined batch tiles; params are single-buffered residents ---
    in_specs = [pl.BlockSpec((tm_eff, emb_pad), lambda i: (i, 0))]
    flat_params = []
    for (w, b) in padded_params:
        # Grid-invariant: whole array placed in VMEM once (no double buffering).
        in_specs.append(pl.BlockSpec(memory_space=pltpu.MemorySpace.VMEM))
        in_specs.append(pl.BlockSpec(memory_space=pltpu.MemorySpace.VMEM))
        flat_params.extend([w, b])
    out_spec = pl.BlockSpec((tm_eff, out_pad), lambda i: (i, 0))   # lane-dense output

    kernel = _make_decoder_kernel(num_layers, compute_dtype)

    # --- VMEM budget against the real per-TC capacity ----------------------------------
    param_bytes = sum(
        w.size * jnp.dtype(w.dtype).itemsize + b.size * jnp.dtype(b.dtype).itemsize
        for (w, b) in padded_params
    )
    max_n = max(w.shape[1] for (w, _) in padded_params)
    x_tile_bytes = tm_eff * emb_pad * jnp.dtype(compute_dtype).itemsize
    out_tile_bytes = tm_eff * out_pad * jnp.dtype(out_dtype).itemsize
    act_bytes = tm_eff * max_n * 4 * 2                  # f32 accumulator + working copy
    budget = param_bytes + 2 * (x_tile_bytes + out_tile_bytes) + act_bytes + (4 << 20)
    vmem_cap = _vmem_capacity_bytes()                    # 64 MiB on v7x, 128 MiB v5e/v6e
    vmem_limit = int(min(vmem_cap - (8 << 20), max(16 << 20, budget)))
    # TODO(synk): if single-buffered params exceed ~half of vmem_cap (very wide
    # decompress_dims on v7x), tile the widest layer's N instead of keeping it resident.

    flops = 2 * padded_B * sum(w.shape[0] * w.shape[1] for (w, _) in padded_params)
    bytes_accessed = (
        padded_B * emb_pad * jnp.dtype(compute_dtype).itemsize
        + param_bytes
        + padded_B * out_pad * jnp.dtype(out_dtype).itemsize
    )
    cost = pl.CostEstimate(flops=flops, transcendentals=0, bytes_accessed=bytes_accessed)

    out = pl.pallas_call(
        kernel,
        out_shape=jax.ShapeDtypeStruct((padded_B, out_pad), out_dtype),
        grid_spec=pltpu.PrefetchScalarGridSpec(
            num_scalar_prefetch=0,
            grid=grid,
            in_specs=in_specs,
            out_specs=out_spec,
        ),
        compiler_params=pltpu.CompilerParams(
            dimension_semantics=("parallel",),
            vmem_limit_bytes=vmem_limit,
        ),
        cost_estimate=cost,
    )(x, *flat_params)

    return out[:B, :data_dim], sigma


def decoder_forward_ref(x, params, sigma):
    """Pure-JAX reference (unpadded f32 params) for correctness checking."""
    h = x
    for i, (w, b) in enumerate(params):
        h = h @ w + jnp.reshape(b, (-1,))
        if i < len(params) - 1:
            h = jnp.maximum(h, 0.0)
    return h, sigma


if __name__ == "__main__":
    # Small shapes consistent with the module's forward.
    batch = 2
    embedding_dim = 32
    decompress_dims = (32, 64)
    data_dim = 48

    key = jax.random.PRNGKey(0)
    key, kx = jax.random.split(key)
    x = jax.random.normal(kx, (batch, embedding_dim), jnp.float32)

    params, sigma = init_decoder_params(key, embedding_dim, decompress_dims, data_dim)
    ref_out, ref_sigma = decoder_forward_ref(x, params, sigma)

    # --- f32-weight path (tight tolerance) ---
    p_f32 = prepare_decoder_params(params, weight_dtype=jnp.float32)
    out_f32, sig_f32 = decoder_forward(x, p_f32, sigma)
    out_f32 = jax.block_until_ready(out_f32)
    sig_f32 = jax.block_until_ready(sig_f32)
    assert out_f32.shape == (batch, data_dim), out_f32.shape
    assert out_f32.dtype == jnp.float32, out_f32.dtype
    assert sig_f32.shape == (data_dim,), sig_f32.shape
    assert jnp.allclose(out_f32, ref_out, atol=1e-4, rtol=1e-4), "f32 mismatch vs reference"
    assert jnp.allclose(sig_f32, ref_sigma), "sigma mismatch"

    # --- bf16-weight path (MXU-fast on v6e/v7x); activations bf16 -> looser tolerance ---
    # Note: bf16 activations compound error with depth/width; keep f32 weights if
    # accuracy is critical for large decoders.
    p_bf16 = prepare_decoder_params(params, weight_dtype=jnp.bfloat16)
    out_bf16, sig_bf16 = decoder_forward(x, p_bf16, sigma)
    out_bf16 = jax.block_until_ready(out_bf16)
    assert out_bf16.shape == (batch, data_dim), out_bf16.shape
    assert out_bf16.dtype == jnp.float32, out_bf16.dtype
    assert jnp.allclose(out_bf16, ref_out, atol=5e-2, rtol=5e-2), "bf16 mismatch vs reference"
    assert jnp.allclose(sig_bf16, ref_sigma), "sigma mismatch"

    # --- optional bf16 writeback (halves output HBM store traffic) ---
    out_bf16o, _ = decoder_forward(x, p_bf16, sigma, out_dtype=jnp.bfloat16)
    out_bf16o = jax.block_until_ready(out_bf16o)
    assert out_bf16o.shape == (batch, data_dim) and out_bf16o.dtype == jnp.bfloat16
    assert jnp.allclose(out_bf16o.astype(jnp.float32), ref_out, atol=5e-2, rtol=5e-2)

    print("KERNEL_OK")
</pallas_src>

<mosaic_0001>
module attributes {stable_mosaic.version = 11 : i64} {
  func.func @kernel(%arg0: i32, %arg1: memref<8x128xf32, #tpu.memory_space<vmem>>, %arg2: memref<128x128xf32, #tpu.memory_space<vmem>>, %arg3: memref<1x128xf32, #tpu.memory_space<vmem>>, %arg4: memref<128x128xf32, #tpu.memory_space<vmem>>, %arg5: memref<1x128xf32, #tpu.memory_space<vmem>>, %arg6: memref<128x128xf32, #tpu.memory_space<vmem>>, %arg7: memref<1x128xf32, #tpu.memory_space<vmem>>, %arg8: memref<8x128xf32, #tpu.memory_space<vmem>>) attributes {dimension_semantics = [#tpu.dimension_semantics<parallel>], iteration_bounds = array<i64: 1>, scalar_prefetch = 0 : i64, scratch_operands = 0 : i64, tpu.core_type = #tpu.core_type<tc>, window_params = [{transform_indices = @transform_0, window_bounds = array<i64: 8, 128>}, {pipeline_mode = #tpu.pipeline_mode<synchronous>, transform_indices = @transform_1, window_bounds = array<i64: 128, 128>}, {pipeline_mode = #tpu.pipeline_mode<synchronous>, transform_indices = @transform_2, window_bounds = array<i64: 1, 128>}, {pipeline_mode = #tpu.pipeline_mode<synchronous>, transform_indices = @transform_3, window_bounds = array<i64: 128, 128>}, {pipeline_mode = #tpu.pipeline_mode<synchronous>, transform_indices = @transform_4, window_bounds = array<i64: 1, 128>}, {pipeline_mode = #tpu.pipeline_mode<synchronous>, transform_indices = @transform_5, window_bounds = array<i64: 128, 128>}, {pipeline_mode = #tpu.pipeline_mode<synchronous>, transform_indices = @transform_6, window_bounds = array<i64: 1, 128>}, {transform_indices = @transform_7, window_bounds = array<i64: 8, 128>}]} {
    %c0 = arith.constant 0 : index
    %c0_0 = arith.constant 0 : index
    %0 = vector.load %arg1[%c0, %c0_0] : memref<8x128xf32, #tpu.memory_space<vmem>>, vector<8x128xf32>
    %c0_1 = arith.constant 0 : index
    %c0_2 = arith.constant 0 : index
    %1 = vector.load %arg2[%c0_1, %c0_2] : memref<128x128xf32, #tpu.memory_space<vmem>>, vector<128x128xf32>
    %c0_3 = arith.constant 0 : index
    %c0_4 = arith.constant 0 : index
    %2 = vector.load %arg3[%c0_3, %c0_4] : memref<1x128xf32, #tpu.memory_space<vmem>>, vector<1x128xf32>
    %cst = arith.constant dense<0.000000e+00> : vector<8x128xf32>
    %3 = tpu.matmul %0, %1, %cst {dimension_numbers = #tpu.dot_dimension_numbers<[1], [0], [0], [1], [0, 0, 1, 1], [], []>} : vector<8x128xf32>, vector<128x128xf32>, vector<8x128xf32> -> vector<8x128xf32>
    %4 = vector.broadcast %2 : vector<1x128xf32> to vector<8x128xf32>
    %5 = arith.addf %3, %4 : vector<8x128xf32>
    %cst_5 = arith.constant 0.000000e+00 : f32
    %6 = vector.broadcast %cst_5 : f32 to vector<8x128xf32>
    %7 = arith.maximumf %5, %6 : vector<8x128xf32>
    %c0_6 = arith.constant 0 : index
    %c0_7 = arith.constant 0 : index
    %8 = vector.load %arg4[%c0_6, %c0_7] : memref<128x128xf32, #tpu.memory_space<vmem>>, vector<128x128xf32>
    %c0_8 = arith.constant 0 : index
    %c0_9 = arith.constant 0 : index
    %9 = vector.load %arg5[%c0_8, %c0_9] : memref<1x128xf32, #tpu.memory_space<vmem>>, vector<1x128xf32>
    %cst_10 = arith.constant dense<0.000000e+00> : vector<8x128xf32>
    %10 = tpu.matmul %7, %8, %cst_10 {dimension_numbers = #tpu.dot_dimension_numbers<[1], [0], [0], [1], [0, 0, 1, 1], [], []>} : vector<8x128xf32>, vector<128x128xf32>, vector<8x128xf32> -> vector<8x128xf32>
    %11 = vector.broadcast %9 : vector<1x128xf32> to vector<8x128xf32>
    %12 = arith.addf %10, %11 : vector<8x128xf32>
    %cst_11 = arith.constant 0.000000e+00 : f32
    %13 = vector.broadcast %cst_11 : f32 to vector<8x128xf32>
    %14 = arith.maximumf %12, %13 : vector<8x128xf32>
    %c0_12 = arith.constant 0 : index
    %c0_13 = arith.constant 0 : index
    %15 = vector.load %arg6[%c0_12, %c0_13] : memref<128x128xf32, #tpu.memory_space<vmem>>, vector<128x128xf32>
    %c0_14 = arith.constant 0 : index
    %c0_15 = arith.constant 0 : index
    %16 = vector.load %arg7[%c0_14, %c0_15] : memref<1x128xf32, #tpu.memory_space<vmem>>, vector<1x128xf32>
    %cst_16 = arith.constant dense<0.000000e+00> : vector<8x128xf32>
    %17 = tpu.matmul %14, %15, %cst_16 {dimension_numbers = #tpu.dot_dimension_numbers<[1], [0], [0], [1], [0, 0, 1, 1], [], []>} : vector<8x128xf32>, vector<128x128xf32>, vector<8x128xf32> -> vector<8x128xf32>
    %18 = vector.broadcast %16 : vector<1x128xf32> to vector<8x128xf32>
    %19 = arith.addf %17, %18 : vector<8x128xf32>
    %c0_17 = arith.constant 0 : index
    %c0_18 = arith.constant 0 : index
    %20 = vector.load %arg8[%c0_17, %c0_18] : memref<8x128xf32, #tpu.memory_space<vmem>>, vector<8x128xf32>
    tpu.vector_store %arg8[%c0_17, %c0_18], %19 {strides = array<i32>} : memref<8x128xf32, #tpu.memory_space<vmem>>, vector<8x128xf32>,
    return
  }
  func.func @transform_0(%arg0: i32) -> (i32, i32) {
    %c0_i32 = arith.constant 0 : i32
    %c0_i32_0 = arith.constant 0 : i32
    return %arg0, %c0_i32 : i32, i32
  }
  func.func @transform_1(%arg0: i32) -> (i32, i32) {
    %c0_i32 = arith.constant 0 : i32
    %c0_i32_0 = arith.constant 0 : i32
    %c0_i32_1 = arith.constant 0 : i32
    return %c0_i32, %c0_i32_0 : i32, i32
  }
  func.func @transform_2(%arg0: i32) -> (i32, i32) {
    %c0_i32 = arith.constant 0 : i32
    %c0_i32_0 = arith.constant 0 : i32
    %c0_i32_1 = arith.constant 0 : i32
    return %c0_i32, %c0_i32_0 : i32, i32
  }
  func.func @transform_3(%arg0: i32) -> (i32, i32) {
    %c0_i32 = arith.constant 0 : i32
    %c0_i32_0 = arith.constant 0 : i32
    %c0_i32_1 = arith.constant 0 : i32
    return %c0_i32, %c0_i32_0 : i32, i32
  }
  func.func @transform_4(%arg0: i32) -> (i32, i32) {
    %c0_i32 = arith.constant 0 : i32
    %c0_i32_0 = arith.constant 0 : i32
    %c0_i32_1 = arith.constant 0 : i32
    return %c0_i32, %c0_i32_0 : i32, i32
  }
  func.func @transform_5(%arg0: i32) -> (i32, i32) {
    %c0_i32 = arith.constant 0 : i32
    %c0_i32_0 = arith.constant 0 : i32
    %c0_i32_1 = arith.constant 0 : i32
    return %c0_i32, %c0_i32_0 : i32, i32
  }
  func.func @transform_6(%arg0: i32) -> (i32, i32) {
    %c0_i32 = arith.constant 0 : i32
    %c0_i32_0 = arith.constant 0 : i32
    %c0_i32_1 = arith.constant 0 : i32
    return %c0_i32, %c0_i32_0 : i32, i32
  }
  func.func @transform_7(%arg0: i32) -> (i32, i32) {
    %c0_i32 = arith.constant 0 : i32
    %c0_i32_0 = arith.constant 0 : i32
    return %arg0, %c0_i32 : i32, i32
  }
}

</mosaic_0001>

<llo_original>
// kernel: decoder_forward.1
$region0: #{decoder_forward.1}
  #allocation0 [shape = 'u32[]', space=smem, size = 0x4, offset = 0x4, fixed_abs, tag = 'smem constant byte address 0x4 - core index']
  #allocation1 [shape = 'u32[72,128]{1,0:T(1,128)}', space=vmem, size = 0x9000, scoped, tag = 'internal scratch']
  %s0 = inlined_call_operand.vmem [shape: f32[8,128], index: 0, kind: input, shape index: {}]
  %s1 = inlined_call_operand.hbm [shape: f32[128,128], index: 1, kind: input, shape index: {}]
  %s2 = inlined_call_operand.vmem [shape: f32[1,128], index: 2, kind: input, shape index: {}]
  %s3 = inlined_call_operand.hbm [shape: f32[128,128], index: 3, kind: input, shape index: {}]
  %s4 = inlined_call_operand.vmem [shape: f32[1,128], index: 4, kind: input, shape index: {}]
  %s5 = inlined_call_operand.hbm [shape: f32[128,128], index: 5, kind: input, shape index: {}]
  %s6 = inlined_call_operand.vmem [shape: f32[1,128], index: 6, kind: input, shape index: {}]
  %s7 = inlined_call_operand.vmem [shape: f32[8,128], index: 7, kind: output, shape index: {}]
  %s8 = sld [smem:[#allocation0]]
  $region50: #{decoder_forward.1} parent=0
    _
  %s10 = ssub.s32 1, %s8
  %s11 = scalar_select 0, %s10, %s8
  $region1: #{decoder_forward.1} parent=0
    #allocation2 [shape = 'u8[65536]{0}', space=vmem, size = 0x10000, scoped, tag = 'input window, operand 1, single buffered']
    #allocation3 [shape = 's32[1]{0}', space=sflag, size = 0x4, scoped, tag = 'scoped memory for decoder_forward.1']
    #allocation4 [shape = 'u8[65536]{0}', space=vmem, size = 0x10000, scoped, tag = 'input window, operand 3, single buffered']
    #allocation5 [shape = 's32[1]{0}', space=sflag, size = 0x4, scoped, tag = 'scoped memory for decoder_forward.1']
    #allocation6 [shape = 'u8[65536]{0}', space=vmem, size = 0x10000, scoped, tag = 'input window, operand 5, single buffered']
    %12 = vsyncpa [#allocation3], 0
    %13 = vsyncpa [#allocation5], 0
    // Predicated region
    $region2: #{decoder_forward.1} parent=1 // pred_check
      _
    $region3: #{decoder_forward.1} parent=1 // pred_check_branch
      %15 = sbr.rel (0) target = $region5
    $region4: #{decoder_forward.1} parent=1 // pred_region
      _
    $region5: #{decoder_forward.1} parent=1 // pred_fallthru
      _
    // Predicated region
    $region6: #{decoder_forward.1} parent=1 // pred_check
      _
    $region7: #{decoder_forward.1} parent=1 // pred_check_branch
      %17 = sbr.rel (0) target = $region9
    $region8: #{decoder_forward.1} parent=1 // pred_region
      %19 = vsyncadd [#allocation3], 0
      %s20 = sshll.u32 %s1, 4
      %s21 = int_to_ptr.hbm [resolvable:$true] %s20
      %s22 = sshll.u32 [#allocation2], 4
      %s23 = int_to_ptr.vmem [resolvable:$true] %s22
      %28 = dma.hbm_to_vmem [thread:$0]  %s21, 2048, %s23, [#allocation3], 128, 128, 8
    $region9: #{decoder_forward.1} parent=1 // pred_fallthru
      _
    // Predicated region
    $region10: #{decoder_forward.1} parent=1 // pred_check
      _
    $region11: #{decoder_forward.1} parent=1 // pred_check_branch
      %30 = sbr.rel (0) target = $region13
    $region12: #{decoder_forward.1} parent=1 // pred_region
      _
    $region13: #{decoder_forward.1} parent=1 // pred_fallthru
      _
    // Predicated region
    $region14: #{decoder_forward.1} parent=1 // pred_check
      _
    $region15: #{decoder_forward.1} parent=1 // pred_check_branch
      %32 = sbr.rel (0) target = $region17
    $region16: #{decoder_forward.1} parent=1 // pred_region
      %34 = vsyncadd [#allocation5], 0
      %s35 = sshll.u32 %s3, 4
      %s36 = int_to_ptr.hbm [resolvable:$true] %s35
      %s37 = sshll.u32 [#allocation4], 4
      %s38 = int_to_ptr.vmem [resolvable:$true] %s37
      %43 = dma.hbm_to_vmem [thread:$0]  %s36, 2048, %s38, [#allocation5], 128, 128, 8
    $region17: #{decoder_forward.1} parent=1 // pred_fallthru
      _
    // Predicated region
    $region18: #{decoder_forward.1} parent=1 // pred_check
      _
    $region19: #{decoder_forward.1} parent=1 // pred_check_branch
      %45 = sbr.rel (0) target = $region21
    $region20: #{decoder_forward.1} parent=1 // pred_region
      _
    $region21: #{decoder_forward.1} parent=1 // pred_fallthru
      _
    // Predicated region
    $region22: #{decoder_forward.1} parent=1 // pred_check
      _
    $region23: #{decoder_forward.1} parent=1 // pred_check_branch
      %47 = sbr.rel (0) target = $region25
    $region24: #{decoder_forward.1} parent=1 // pred_region
      %49 = vsyncadd [#allocation5], 0
      %s50 = sshll.u32 %s5, 4
      %s51 = int_to_ptr.hbm [resolvable:$true] %s50
      %s52 = sshll.u32 [#allocation6], 4
      %s53 = int_to_ptr.vmem [resolvable:$true] %s52
      %58 = dma.hbm_to_vmem [thread:$0]  %s51, 2048, %s53, [#allocation5], 128, 128, 8
    $region25: #{decoder_forward.1} parent=1 // pred_fallthru
      _
    // Predicated region
    $region26: #{decoder_forward.1} parent=1 // pred_check
      _
    $region27: #{decoder_forward.1} parent=1 // pred_check_branch
      %60 = sbr.rel (0) target = $region29
    $region28: #{decoder_forward.1} parent=1 // pred_region
      _
    $region29: #{decoder_forward.1} parent=1 // pred_fallthru
      _
    // Predicated region
    $region30: #{decoder_forward.1} parent=1 // pred_check
      _
    $region31: #{decoder_forward.1} parent=1 // pred_check_branch
      %62 = sbr.rel (0) target = $region33
    $region32: #{decoder_forward.1} parent=1 // pred_region
      %64 = dma.done [#allocation3], 2048
    $region33: #{decoder_forward.1} parent=1 // pred_fallthru
      _
    // Predicated region
    $region34: #{decoder_forward.1} parent=1 // pred_check
      _
    $region35: #{decoder_forward.1} parent=1 // pred_check_branch
      %66 = sbr.rel (0) target = $region37
    $region36: #{decoder_forward.1} parent=1 // pred_region
      %68 = dma.done [#allocation5], 2048
    $region37: #{decoder_forward.1} parent=1 // pred_fallthru
      _
    // Predicated region
    $region38: #{decoder_forward.1} parent=1 // pred_check
      _
    $region39: #{decoder_forward.1} parent=1 // pred_check_branch
      %70 = sbr.rel (0) target = $region41
    $region40: #{decoder_forward.1} parent=1 // pred_region
      %72 = dma.done [#allocation5], 2048
    $region41: #{decoder_forward.1} parent=1 // pred_fallthru
      _
    %v73 = vld [vmem:[%s0] sm:$0xff]
    %v74 = vld [vmem:[#allocation2] sm:$0xff]
    %v75 = vld [vmem:[#allocation2 + $0x8] sm:$0xff]
    %v76 = vld [vmem:[#allocation2 + $0x10] sm:$0xff]
    %v77 = vld [vmem:[#allocation2 + $0x18] sm:$0xff]
    %v78 = vld [vmem:[#allocation2 + $0x20] sm:$0xff]
    %v79 = vld [vmem:[#allocation2 + $0x28] sm:$0xff]
    %v80 = vld [vmem:[#allocation2 + $0x30] sm:$0xff]
    %v81 = vld [vmem:[#allocation2 + $0x38] sm:$0xff]
    %v82 = vld [vmem:[#allocation2 + $0x40] sm:$0xff]
    %v83 = vld [vmem:[#allocation2 + $0x48] sm:$0xff]
    %v84 = vld [vmem:[#allocation2 + $0x50] sm:$0xff]
    %v85 = vld [vmem:[#allocation2 + $0x58] sm:$0xff]
    %v86 = vld [vmem:[#allocation2 + $0x60] sm:$0xff]
    %v87 = vld [vmem:[#allocation2 + $0x68] sm:$0xff]
    %v88 = vld [vmem:[#allocation2 + $0x70] sm:$0xff]
    %v89 = vld [vmem:[#allocation2 + $0x78] sm:$0xff]
    %v90 = vld [vmem:[%s2] sm:$0x1]
    %v92 = vperm.slane %v90, 0
    %94 = vmatpush.msra.mxu0 %v89
    %95 = vmatpush.msra.mxu0 %v88
    %96 = vmatpush.msra.mxu0 %v87
    %97 = vmatpush.msra.mxu0 %v86
    %98 = vmatpush.msra.mxu0 %v85
    %99 = vmatpush.msra.mxu0 %v84
    %100 = vmatpush.msra.mxu0 %v83
    %101 = vmatpush.msra.mxu0 %v82
    %102 = vmatpush.msra.mxu0 %v81
    %103 = vmatpush.msra.mxu0 %v80
    %104 = vmatpush.msra.mxu0 %v79
    %105 = vmatpush.msra.mxu0 %v78
    %106 = vmatpush.msra.mxu0 %v77
    %107 = vmatpush.msra.mxu0 %v76
    %108 = vmatpush.msra.mxu0 %v75
    %109 = vmatpush.msra.mxu0 %v74
    %110 = vmatmul.f32.gmra.mxu0 %v73
    %v111 = vpop.f32.mrf.mxu0
    %v112 = vadd.f32 %v92, %v111
    %113 = vdwg.mxu0
    %v114 = vmax.f32 %v112, 0.0
    %v115 = vld [vmem:[#allocation4] sm:$0xff]
    %v116 = vld [vmem:[#allocation4 + $0x8] sm:$0xff]
    %v117 = vld [vmem:[#allocation4 + $0x10] sm:$0xff]
    %v118 = vld [vmem:[#allocation4 + $0x18] sm:$0xff]
    %v119 = vld [vmem:[#allocation4 + $0x20] sm:$0xff]
    %v120 = vld [vmem:[#allocation4 + $0x28] sm:$0xff]
    %v121 = vld [vmem:[#allocation4 + $0x30] sm:$0xff]
    %v122 = vld [vmem:[#allocation4 + $0x38] sm:$0xff]
    %v123 = vld [vmem:[#allocation4 + $0x40] sm:$0xff]
    %v124 = vld [vmem:[#allocation4 + $0x48] sm:$0xff]
    %v125 = vld [vmem:[#allocation4 + $0x50] sm:$0xff]
    %v126 = vld [vmem:[#allocation4 + $0x58] sm:$0xff]
    %v127 = vld [vmem:[#allocation4 + $0x60] sm:$0xff]
    %v128 = vld [vmem:[#allocation4 + $0x68] sm:$0xff]
    %v129 = vld [vmem:[#allocation4 + $0x70] sm:$0xff]
    %v130 = vld [vmem:[#allocation4 + $0x78] sm:$0xff]
    %v131 = vld [vmem:[%s4] sm:$0x1]
    %v133 = vperm.slane %v131, 0
    %135 = vmatpush.msra.mxu0 %v130
    %136 = vmatpush.msra.mxu0 %v129
    %137 = vmatpush.msra.mxu0 %v128
    %138 = vmatpush.msra.mxu0 %v127
    %139 = vmatpush.msra.mxu0 %v126
    %140 = vmatpush.msra.mxu0 %v125
    %141 = vmatpush.msra.mxu0 %v124
    %142 = vmatpush.msra.mxu0 %v123
    %143 = vmatpush.msra.mxu0 %v122
    %144 = vmatpush.msra.mxu0 %v121
    %145 = vmatpush.msra.mxu0 %v120
    %146 = vmatpush.msra.mxu0 %v119
    %147 = vmatpush.msra.mxu0 %v118
    %148 = vmatpush.msra.mxu0 %v117
    %149 = vmatpush.msra.mxu0 %v116
    %150 = vmatpush.msra.mxu0 %v115
    %151 = vmatmul.f32.gmra.mxu0 %v114
    %v152 = vpop.f32.mrf.mxu0
    %v153 = vadd.f32 %v133, %v152
    %154 = vdwg.mxu0
    %v155 = vmax.f32 %v153, 0.0
    %v156 = vld [vmem:[#allocation6] sm:$0xff]
    %v157 = vld [vmem:[#allocation6 + $0x8] sm:$0xff]
    %v158 = vld [vmem:[#allocation6 + $0x10] sm:$0xff]
    %v159 = vld [vmem:[#allocation6 + $0x18] sm:$0xff]
    %v160 = vld [vmem:[#allocation6 + $0x20] sm:$0xff]
    %v161 = vld [vmem:[#allocation6 + $0x28] sm:$0xff]
    %v162 = vld [vmem:[#allocation6 + $0x30] sm:$0xff]
    %v163 = vld [vmem:[#allocation6 + $0x38] sm:$0xff]
    %v164 = vld [vmem:[#allocation6 + $0x40] sm:$0xff]
    %v165 = vld [vmem:[#allocation6 + $0x48] sm:$0xff]
    %v166 = vld [vmem:[#allocation6 + $0x50] sm:$0xff]
    %v167 = vld [vmem:[#allocation6 + $0x58] sm:$0xff]
    %v168 = vld [vmem:[#allocation6 + $0x60] sm:$0xff]
    %v169 = vld [vmem:[#allocation6 + $0x68] sm:$0xff]
    %v170 = vld [vmem:[#allocation6 + $0x70] sm:$0xff]
    %v171 = vld [vmem:[#allocation6 + $0x78] sm:$0xff]
    %v172 = vld [vmem:[%s6] sm:$0x1]
    %v174 = vperm.slane %v172, 0
    %176 = vmatpush.msra.mxu0 %v171
    %177 = vmatpush.msra.mxu0 %v170
    %178 = vmatpush.msra.mxu0 %v169
    %179 = vmatpush.msra.mxu0 %v168
    %180 = vmatpush.msra.mxu0 %v167
    %181 = vmatpush.msra.mxu0 %v166
    %182 = vmatpush.msra.mxu0 %v165
    %183 = vmatpush.msra.mxu0 %v164
    %184 = vmatpush.msra.mxu0 %v163
    %185 = vmatpush.msra.mxu0 %v162
    %186 = vmatpush.msra.mxu0 %v161
    %187 = vmatpush.msra.mxu0 %v160
    %188 = vmatpush.msra.mxu0 %v159
    %189 = vmatpush.msra.mxu0 %v158
    %190 = vmatpush.msra.mxu0 %v157
    %191 = vmatpush.msra.mxu0 %v156
    %192 = vmatmul.f32.gmra.mxu0 %v155
    %v193 = vpop.f32.mrf.mxu0
    %v194 = vadd.f32 %v174, %v193
    %195 = vdwg.mxu0
    %196 = vst [vmem:[%s7] sm:$0xff] %v194
    // Predicated region
    $region42: #{decoder_forward.1} parent=1 // pred_check
      _
    $region43: #{decoder_forward.1} parent=1 // pred_check_branch
      %198 = sbr.rel (0) target = $region45
    $region44: #{decoder_forward.1} parent=1 // pred_region
      _
    $region45: #{decoder_forward.1} parent=1 // pred_fallthru
      _
    // Predicated region
    $region46: #{decoder_forward.1} parent=1 // pred_check
      _
    $region47: #{decoder_forward.1} parent=1 // pred_check_branch
      %200 = sbr.rel (0) target = $region49
    $region48: #{decoder_forward.1} parent=1 // pred_region
      _
    $region49: #{decoder_forward.1} parent=1 // pred_fallthru
      _
    %201 = vsyncpa [#allocation3], 1
    %202 = vsyncpa [#allocation5], 1

</llo_original>
